<compile_context>
chip_gen: v7x
topology: tpu7x:2x2x1
jax: 0.10.0
libtpu: 0.0.40
codegen_flags: <defaults>
</compile_context>

<pallas_src>
import math

import jax
import jax.numpy as jnp
from jax.experimental import pallas as pl
from jax.experimental.pallas import tpu as pltpu

# Folded-rows-per-tile cap.  2048 folded rows == 131072 original batch rows.
# Per-tile VMEM: x (2048, 256) f32 = 2 MiB, out (2048, 128) f32 = 1 MiB,
# x2 double-buffering = 6 MiB (+128 KiB resident weight) -- v7x-safe.
_MAX_TM_ROWS = 2048


def _round_up(n: int, m: int) -> int:
    return -(-n // m) * m


def _fold_factor(d_in: int, d_out: int) -> int:
    """Smallest G such that G*d_in and G*d_out are both multiples of 128."""
    g_in = 128 // math.gcd(128, d_in)
    g_out = 128 // math.gcd(128, d_out)
    return g_in * g_out // math.gcd(g_in, g_out)


def _linear_kernel(w_ref, b_ref, x_ref, o_ref):
    """o = x_tile @ W_big + b_big   (single MXU dot + dense bias add).

    w_ref: (G*d_in, G*d_out)  VMEM, block-diagonal kron(I_G, W.T), resident
    b_ref: (1, G*d_out)       VMEM, bias tiled G times, resident
    x_ref: (tm, G*d_in)       VMEM, G batch rows folded onto the lane axis
    o_ref: (tm, G*d_out)      VMEM, lane-dense (128-multiple) output tile
    """
    o_ref[...] = (
        jnp.dot(x_ref[...], w_ref[...], preferred_element_type=jnp.float32)
        + b_ref[...]
    ).astype(o_ref.dtype)


@jax.jit
def dummy_net_forward(x, weight, bias):
    """Equivalent of DummyNet.forward: x @ weight.T + bias.

    x:      (B, d_in)      float32
    weight: (d_out, d_in)  float32  (PyTorch nn.Linear layout)
    bias:   (d_out,)       float32
    returns (B, d_out)
    """
    B, d_in = x.shape
    d_out = weight.shape[0]

    G = _fold_factor(d_in, d_out)            # 64 for the (4 -> 2) DummyNet

    # Pad the batch to a multiple of G.  No-op (no copy) for aligned batches.
    Bp = _round_up(B, G)
    if Bp != B:
        x = jnp.pad(x, ((0, Bp - B), (0, 0)))
    R = Bp // G

    # Free row-major reshape: fold G batch rows into the lane axis.
    x_f = x.reshape(R, G * d_in)

    # Block-diagonal weight (G copies of W.T) and tiled bias; 128 KiB one-time.
    w_big = jnp.kron(jnp.eye(G, dtype=x.dtype), weight.T.astype(x.dtype))
    b_big = jnp.tile(bias.astype(x.dtype), G)[None, :]

    # Tile only the folded-batch axis; guarantee >= 2 blocks when there is
    # enough work so both v7x TensorCores participate.
    if R <= 8:
        tm = R                                # full-dim block (small batch)
    else:
        tm = min(_MAX_TM_ROWS, _round_up(pl.cdiv(R, 2), 8))
    grid = (pl.cdiv(R, tm),)

    out_f = pl.pallas_call(
        _linear_kernel,
        out_shape=jax.ShapeDtypeStruct((R, G * d_out), x.dtype),
        grid=grid,
        in_specs=[
            # Weight + bias: same block every step -> VMEM-resident.
            pl.BlockSpec((G * d_in, G * d_out), lambda i: (0, 0)),
            pl.BlockSpec((1, G * d_out), lambda i: (0, 0)),
            # Folded activations: tile the (folded) batch axis only.
            pl.BlockSpec((tm, G * d_in), lambda i: (i, 0)),
        ],
        out_specs=pl.BlockSpec((tm, G * d_out), lambda i: (i, 0)),
        compiler_params=pltpu.CompilerParams(
            dimension_semantics=("parallel",),   # v7x: shard grid over 2 TCs
        ),
    )(w_big, b_big, x_f)

    out = out_f.reshape(Bp, d_out)            # free reshape back to (Bp, d_out)
    return out[:B] if Bp != B else out


if __name__ == "__main__":
    input_dim, output_dim = 4, 2

    key = jax.random.PRNGKey(0)
    kx, kw, kb = jax.random.split(key, 3)

    # Deterministic parameter init (same shapes as nn.Linear(4, 2)).
    bound = 1.0 / (input_dim ** 0.5)
    weight = jax.random.uniform(kw, (output_dim, input_dim),
                                minval=-bound, maxval=bound, dtype=jnp.float32)
    bias = jax.random.uniform(kb, (output_dim,),
                              minval=-bound, maxval=bound, dtype=jnp.float32)

    # Unaligned, padded and multi-grid-block batch sizes.
    for batch in (8, 133, 4096):
        xb = jax.random.normal(jax.random.fold_in(kx, batch),
                               (batch, input_dim), dtype=jnp.float32)
        out = jax.block_until_ready(dummy_net_forward(xb, weight, bias))
        ref = xb @ weight.T + bias
        assert out.shape == (batch, output_dim)
        assert jnp.allclose(out, ref, atol=1e-5, rtol=1e-5), f"mismatch B={batch}"

    print("KERNEL_OK")
</pallas_src>

<mosaic_0001>
module attributes {stable_mosaic.version = 11 : i64} {
  func.func @_linear_kernel(%arg0: i32, %arg1: memref<256x128xf32, #tpu.memory_space<vmem>>, %arg2: memref<1x128xf32, #tpu.memory_space<vmem>>, %arg3: memref<1x256xf32, #tpu.memory_space<vmem>>, %arg4: memref<1x128xf32, #tpu.memory_space<vmem>>) attributes {dimension_semantics = [#tpu.dimension_semantics<parallel>], iteration_bounds = array<i64: 1>, scalar_prefetch = 0 : i64, scratch_operands = 0 : i64, tpu.core_type = #tpu.core_type<tc>, window_params = [{pipeline_mode = #tpu.pipeline_mode<synchronous>, transform_indices = @transform_0, window_bounds = array<i64: 256, 128>}, {pipeline_mode = #tpu.pipeline_mode<synchronous>, transform_indices = @transform_1, window_bounds = array<i64: 1, 128>}, {transform_indices = @transform_2, window_bounds = array<i64: 1, 256>}, {transform_indices = @transform_3, window_bounds = array<i64: 1, 128>}]} {
    %c0 = arith.constant 0 : index
    %c0_0 = arith.constant 0 : index
    %0 = vector.load %arg3[%c0, %c0_0] : memref<1x256xf32, #tpu.memory_space<vmem>>, vector<1x256xf32>
    %c0_1 = arith.constant 0 : index
    %c0_2 = arith.constant 0 : index
    %1 = vector.load %arg1[%c0_1, %c0_2] : memref<256x128xf32, #tpu.memory_space<vmem>>, vector<256x128xf32>
    %cst = arith.constant dense<0.000000e+00> : vector<1x128xf32>
    %2 = tpu.matmul %0, %1, %cst {dimension_numbers = #tpu.dot_dimension_numbers<[1], [0], [0], [1], [0, 0, 1, 1], [], []>} : vector<1x256xf32>, vector<256x128xf32>, vector<1x128xf32> -> vector<1x128xf32>
    %c0_3 = arith.constant 0 : index
    %c0_4 = arith.constant 0 : index
    %3 = vector.load %arg2[%c0_3, %c0_4] : memref<1x128xf32, #tpu.memory_space<vmem>>, vector<1x128xf32>
    %4 = arith.addf %2, %3 : vector<1x128xf32>
    %c0_5 = arith.constant 0 : index
    %c0_6 = arith.constant 0 : index
    %5 = vector.load %arg4[%c0_5, %c0_6] : memref<1x128xf32, #tpu.memory_space<vmem>>, vector<1x128xf32>
    tpu.vector_store %arg4[%c0_5, %c0_6], %4 {strides = array<i32>} : memref<1x128xf32, #tpu.memory_space<vmem>>, vector<1x128xf32>,
    return
  }
  func.func @transform_0(%arg0: i32) -> (i32, i32) {
    %c0_i32 = arith.constant 0 : i32
    %c0_i32_0 = arith.constant 0 : i32
    %c0_i32_1 = arith.constant 0 : i32
    return %c0_i32, %c0_i32_0 : i32, i32
  }
  func.func @transform_1(%arg0: i32) -> (i32, i32) {
    %c0_i32 = arith.constant 0 : i32
    %c0_i32_0 = arith.constant 0 : i32
    %c0_i32_1 = arith.constant 0 : i32
    return %c0_i32, %c0_i32_0 : i32, i32
  }
  func.func @transform_2(%arg0: i32) -> (i32, i32) {
    %c0_i32 = arith.constant 0 : i32
    %c0_i32_0 = arith.constant 0 : i32
    return %arg0, %c0_i32 : i32, i32
  }
  func.func @transform_3(%arg0: i32) -> (i32, i32) {
    %c0_i32 = arith.constant 0 : i32
    %c0_i32_0 = arith.constant 0 : i32
    return %arg0, %c0_i32 : i32, i32
  }
}

</mosaic_0001>

<llo_original>
// kernel: tile.8
$region0: #{tile.8}
  #allocation0 [shape = 's32[1]{0}', space=sflag, size = 0x4, scoped, tag = 'scoped memory for tile.8']
  %s0 = inlined_call_operand.vmem [shape: f32[2], index: 0, kind: input, shape index: {}]
  %s1 = inlined_call_operand.vmem [shape: f32[64,2], index: 1, kind: output, shape index: {}]
  // Predicated region
  $region2: #{tile.8} parent=0 // pred_check
    _
  $region3: #{tile.8} parent=0 // pred_check_branch
    %3 = sbr.rel (0) target = $region5
  $region4: #{tile.8} parent=0 // pred_region
    _
  $region5: #{tile.8} parent=0 // pred_fallthru
    _
  %v4 = vld [vmem:[%s0] ss:$0 sm:$0xff]
  %5 = vst [vmem:[%s1] sm:$0xff] %v4
  %s6 = scalar_lea.vmem %s1, 8
  %7 = vst [vmem:[%s6] sm:$0xff] %v4
  %s8 = scalar_lea.vmem %s1, 16
  %9 = vst [vmem:[%s8] sm:$0xff] %v4
  %s10 = scalar_lea.vmem %s1, 24
  %11 = vst [vmem:[%s10] sm:$0xff] %v4
  %s12 = scalar_lea.vmem %s1, 32
  %13 = vst [vmem:[%s12] sm:$0xff] %v4
  %s14 = scalar_lea.vmem %s1, 40
  %15 = vst [vmem:[%s14] sm:$0xff] %v4
  %s16 = scalar_lea.vmem %s1, 48
  %17 = vst [vmem:[%s16] sm:$0xff] %v4
  %s18 = scalar_lea.vmem %s1, 56
  %19 = vst [vmem:[%s18] sm:$0xff] %v4

// kernel: tile.9
$region0: #{tile.9}
  %s0 = inlined_call_operand.vmem [shape: f32[64,2], index: 0, kind: input, shape index: {}]
  %s1 = inlined_call_operand.vmem [shape: f32[1,128], index: 1, kind: output, shape index: {}]
  $region1: #{tile.9} parent=0
    #allocation0 [shape = 'u8[4096]{0}', space=vmem, size = 0x1000, scoped, tag = 'scoped mem for output reshape']
    %v2 = vld [vmem:[%s0] sm:$0x1]
    %vm3 = vcmask 15360
    %4 = vst.msk [vmem:[#allocation0] sm:$0x1] %vm3, %v2
    %s5 = scalar_lea.vmem %s0, 63
    %v6 = vld [vmem:[%s5] sm:$0x1]
    %7 = vrot.lane.b32.xlu0 %v6, 126
    %v8 = vpop.permute.xlu0 %7
    %vm9 = vcmask 1048560
    %10 = vst.msk [vmem:[#allocation0] sm:$0x1] %vm9, %v8
    %s11 = scalar_lea.vmem %s0, 62
    %v12 = vld [vmem:[%s11] sm:$0x1]
    %13 = vrot.lane.b32.xlu0 %v12, 124
    %v14 = vpop.permute.xlu0 %13
    %vm15 = vcmask 1032160
    %16 = vst.msk [vmem:[#allocation0] sm:$0x1] %vm15, %v14
    %s17 = scalar_lea.vmem %s0, 61
    %v18 = vld [vmem:[%s17] sm:$0x1]
    %19 = vrot.lane.b32.xlu0 %v18, 122
    %v20 = vpop.permute.xlu0 %19
    %vm21 = vcmask 1015760
    %22 = vst.msk [vmem:[#allocation0] sm:$0x1] %vm21, %v20
    %s23 = scalar_lea.vmem %s0, 60
    %v24 = vld [vmem:[%s23] sm:$0x1]
    %25 = vrot.lane.b32.xlu0 %v24, 120
    %v26 = vpop.permute.xlu0 %25
    %vm27 = vcmask 999360
    %28 = vst.msk [vmem:[#allocation0] sm:$0x1] %vm27, %v26
    %s29 = scalar_lea.vmem %s0, 59
    %v30 = vld [vmem:[%s29] sm:$0x1]
    %31 = vrot.lane.b32.xlu0 %v30, 118
    %v32 = vpop.permute.xlu0 %31
    %vm33 = vcmask 982960
    %34 = vst.msk [vmem:[#allocation0] sm:$0x1] %vm33, %v32
    %s35 = scalar_lea.vmem %s0, 58
    %v36 = vld [vmem:[%s35] sm:$0x1]
    %37 = vrot.lane.b32.xlu0 %v36, 116
    %v38 = vpop.permute.xlu0 %37
    %vm39 = vcmask 966560
    %40 = vst.msk [vmem:[#allocation0] sm:$0x1] %vm39, %v38
    %s41 = scalar_lea.vmem %s0, 57
    %v42 = vld [vmem:[%s41] sm:$0x1]
    %43 = vrot.lane.b32.xlu0 %v42, 114
    %v44 = vpop.permute.xlu0 %43
    %vm45 = vcmask 950160
    %46 = vst.msk [vmem:[#allocation0] sm:$0x1] %vm45, %v44
    %s47 = scalar_lea.vmem %s0, 56
    %v48 = vld [vmem:[%s47] sm:$0x1]
    %49 = vrot.lane.b32.xlu0 %v48, 112
    %v50 = vpop.permute.xlu0 %49
    %vm51 = vcmask 933760
    %52 = vst.msk [vmem:[#allocation0] sm:$0x1] %vm51, %v50
    %s53 = scalar_lea.vmem %s0, 55
    %v54 = vld [vmem:[%s53] sm:$0x1]
    %55 = vrot.lane.b32.xlu0 %v54, 110
    %v56 = vpop.permute.xlu0 %55
    %vm57 = vcmask 917360
    %58 = vst.msk [vmem:[#allocation0] sm:$0x1] %vm57, %v56
    %s59 = scalar_lea.vmem %s0, 54
    %v60 = vld [vmem:[%s59] sm:$0x1]
    %61 = vrot.lane.b32.xlu0 %v60, 108
    %v62 = vpop.permute.xlu0 %61
    %vm63 = vcmask 900960
    %64 = vst.msk [vmem:[#allocation0] sm:$0x1] %vm63, %v62
    %s65 = scalar_lea.vmem %s0, 53
    %v66 = vld [vmem:[%s65] sm:$0x1]
    %67 = vrot.lane.b32.xlu0 %v66, 106
    %v68 = vpop.permute.xlu0 %67
    %vm69 = vcmask 884560
    %70 = vst.msk [vmem:[#allocation0] sm:$0x1] %vm69, %v68
    %s71 = scalar_lea.vmem %s0, 52
    %v72 = vld [vmem:[%s71] sm:$0x1]
    %73 = vrot.lane.b32.xlu0 %v72, 104
    %v74 = vpop.permute.xlu0 %73
    %vm75 = vcmask 868160
    %76 = vst.msk [vmem:[#allocation0] sm:$0x1] %vm75, %v74
    %s77 = scalar_lea.vmem %s0, 51
    %v78 = vld [vmem:[%s77] sm:$0x1]
    %79 = vrot.lane.b32.xlu0 %v78, 102
    %v80 = vpop.permute.xlu0 %79
    %vm81 = vcmask 851760
    %82 = vst.msk [vmem:[#allocation0] sm:$0x1] %vm81, %v80
    %s83 = scalar_lea.vmem %s0, 50
    %v84 = vld [vmem:[%s83] sm:$0x1]
    %85 = vrot.lane.b32.xlu0 %v84, 100
    %v86 = vpop.permute.xlu0 %85
    %vm87 = vcmask 835360
    %88 = vst.msk [vmem:[#allocation0] sm:$0x1] %vm87, %v86
    %s89 = scalar_lea.vmem %s0, 49
    %v90 = vld [vmem:[%s89] sm:$0x1]
    %91 = vrot.lane.b32.xlu0 %v90, 98
    %v92 = vpop.permute.xlu0 %91
    %vm93 = vcmask 818960
    %94 = vst.msk [vmem:[#allocation0] sm:$0x1] %vm93, %v92
    %s95 = scalar_lea.vmem %s0, 48
    %v96 = vld [vmem:[%s95] sm:$0x1]
    %97 = vrot.lane.b32.xlu0 %v96, 96
    %v98 = vpop.permute.xlu0 %97
    %vm99 = vcmask 802560
    %100 = vst.msk [vmem:[#allocation0] sm:$0x1] %vm99, %v98
    %s101 = scalar_lea.vmem %s0, 47
    %v102 = vld [vmem:[%s101] sm:$0x1]
    %103 = vrot.lane.b32.xlu0 %v102, 94
    %v104 = vpop.permute.xlu0 %103
    %vm105 = vcmask 786160
    %106 = vst.msk [vmem:[#allocation0] sm:$0x1] %vm105, %v104
    %s107 = scalar_lea.vmem %s0, 46
    %v108 = vld [vmem:[%s107] sm:$0x1]
    %109 = vrot.lane.b32.xlu0 %v108, 92
    %v110 = vpop.permute.xlu0 %109
    %vm111 = vcmask 769760
    %112 = vst.msk [vmem:[#allocation0] sm:$0x1] %vm111, %v110
    %s113 = scalar_lea.vmem %s0, 45
    %v114 = vld [vmem:[%s113] sm:$0x1]
    %115 = vrot.lane.b32.xlu0 %v114, 90
    %v116 = vpop.permute.xlu0 %115
    %vm117 = vcmask 753360
    %118 = vst.msk [vmem:[#allocation0] sm:$0x1] %vm117, %v116
    %s119 = scalar_lea.vmem %s0, 44
    %v120 = vld [vmem:[%s119] sm:$0x1]
    %121 = vrot.lane.b32.xlu0 %v120, 88
    %v122 = vpop.permute.xlu0 %121
    %vm123 = vcmask 736960
    %124 = vst.msk [vmem:[#allocation0] sm:$0x1] %vm123, %v122
    %s125 = scalar_lea.vmem %s0, 43
    %v126 = vld [vmem:[%s125] sm:$0x1]
    %127 = vrot.lane.b32.xlu0 %v126, 86
    %v128 = vpop.permute.xlu0 %127
    %vm129 = vcmask 720560
    %130 = vst.msk [vmem:[#allocation0] sm:$0x1] %vm129, %v128
    %s131 = scalar_lea.vmem %s0, 42
    %v132 = vld [vmem:[%s131] sm:$0x1]
    %133 = vrot.lane.b32.xlu0 %v132, 84
    %v134 = vpop.permute.xlu0 %133
    %vm135 = vcmask 704160
    %136 = vst.msk [vmem:[#allocation0] sm:$0x1] %vm135, %v134
    %s137 = scalar_lea.vmem %s0, 41
    %v138 = vld [vmem:[%s137] sm:$0x1]
    %139 = vrot.lane.b32.xlu0 %v138, 82
    %v140 = vpop.permute.xlu0 %139
    %vm141 = vcmask 687760
    %142 = vst.msk [vmem:[#allocation0] sm:$0x1] %vm141, %v140
    %s143 = scalar_lea.vmem %s0, 40
    %v144 = vld [vmem:[%s143] sm:$0x1]
    %145 = vrot.lane.b32.xlu0 %v144, 80
    %v146 = vpop.permute.xlu0 %145
    %vm147 = vcmask 671360
    %148 = vst.msk [vmem:[#allocation0] sm:$0x1] %vm147, %v146
    %s149 = scalar_lea.vmem %s0, 39
    %v150 = vld [vmem:[%s149] sm:$0x1]
    %151 = vrot.lane.b32.xlu0 %v150, 78
    %v152 = vpop.permute.xlu0 %151
    %vm153 = vcmask 654960
    %154 = vst.msk [vmem:[#allocation0] sm:$0x1] %vm153, %v152
    %s155 = scalar_lea.vmem %s0, 38
    %v156 = vld [vmem:[%s155] sm:$0x1]
    %157 = vrot.lane.b32.xlu0 %v156, 76
    %v158 = vpop.permute.xlu0 %157
    %vm159 = vcmask 638560
    %160 = vst.msk [vmem:[#allocation0] sm:$0x1] %vm159, %v158
    %s161 = scalar_lea.vmem %s0, 37
    %v162 = vld [vmem:[%s161] sm:$0x1]
    %163 = vrot.lane.b32.xlu0 %v162, 74
    %v164 = vpop.permute.xlu0 %163
    %vm165 = vcmask 622160
    %166 = vst.msk [vmem:[#allocation0] sm:$0x1] %vm165, %v164
    %s167 = scalar_lea.vmem %s0, 36
    %v168 = vld [vmem:[%s167] sm:$0x1]
    %169 = vrot.lane.b32.xlu0 %v168, 72
    %v170 = vpop.permute.xlu0 %169
    %vm171 = vcmask 605760
    %172 = vst.msk [vmem:[#allocation0] sm:$0x1] %vm171, %v170
    %s173 = scalar_lea.vmem %s0, 35
    %v174 = vld [vmem:[%s173] sm:$0x1]
    %175 = vrot.lane.b32.xlu0 %v174, 70
    %v176 = vpop.permute.xlu0 %175
    %vm177 = vcmask 589360
    %178 = vst.msk [vmem:[#allocation0] sm:$0x1] %vm177, %v176
    %s179 = scalar_lea.vmem %s0, 34
    %v180 = vld [vmem:[%s179] sm:$0x1]
    %181 = vrot.lane.b32.xlu0 %v180, 68
    %v182 = vpop.permute.xlu0 %181
    %vm183 = vcmask 572960
    %184 = vst.msk [vmem:[#allocation0] sm:$0x1] %vm183, %v182
    %s185 = scalar_lea.vmem %s0, 33
    %v186 = vld [vmem:[%s185] sm:$0x1]
    %187 = vrot.lane.b32.xlu0 %v186, 66
    %v188 = vpop.permute.xlu0 %187
    %vm189 = vcmask 556560
    %190 = vst.msk [vmem:[#allocation0] sm:$0x1] %vm189, %v188
    %s191 = scalar_lea.vmem %s0, 32
    %v192 = vld [vmem:[%s191] sm:$0x1]
    %193 = vrot.lane.b32.xlu0 %v192, 64
    %v194 = vpop.permute.xlu0 %193
    %vm195 = vcmask 540160
    %196 = vst.msk [vmem:[#allocation0] sm:$0x1] %vm195, %v194
    %s197 = scalar_lea.vmem %s0, 31
    %v198 = vld [vmem:[%s197] sm:$0x1]
    %199 = vrot.lane.b32.xlu0 %v198, 62
    %v200 = vpop.permute.xlu0 %199
    %vm201 = vcmask 523760
    %202 = vst.msk [vmem:[#allocation0] sm:$0x1] %vm201, %v200
    %s203 = scalar_lea.vmem %s0, 30
    %v204 = vld [vmem:[%s203] sm:$0x1]
    %205 = vrot.lane.b32.xlu0 %v204, 60
    %v206 = vpop.permute.xlu0 %205
    %vm207 = vcmask 507360
    %208 = vst.msk [vmem:[#allocation0] sm:$0x1] %vm207, %v206
    %s209 = scalar_lea.vmem %s0, 29
    %v210 = vld [vmem:[%s209] sm:$0x1]
    %211 = vrot.lane.b32.xlu0 %v210, 58
    %v212 = vpop.permute.xlu0 %211
    %vm213 = vcmask 490960
    %214 = vst.msk [vmem:[#allocation0] sm:$0x1] %vm213, %v212
    %s215 = scalar_lea.vmem %s0, 28
    %v216 = vld [vmem:[%s215] sm:$0x1]
    %217 = vrot.lane.b32.xlu0 %v216, 56
    %v218 = vpop.permute.xlu0 %217
    %vm219 = vcmask 474560
    %220 = vst.msk [vmem:[#allocation0] sm:$0x1] %vm219, %v218
    %s221 = scalar_lea.vmem %s0, 27
    %v222 = vld [vmem:[%s221] sm:$0x1]
    %223 = vrot.lane.b32.xlu0 %v222, 54
    %v224 = vpop.permute.xlu0 %223
    %vm225 = vcmask 458160
    %226 = vst.msk [vmem:[#allocation0] sm:$0x1] %vm225, %v224
    %s227 = scalar_lea.vmem %s0, 26
    %v228 = vld [vmem:[%s227] sm:$0x1]
    %229 = vrot.lane.b32.xlu0 %v228, 52
    %v230 = vpop.permute.xlu0 %229
    %vm231 = vcmask 441760
    %232 = vst.msk [vmem:[#allocation0] sm:$0x1] %vm231, %v230
    %s233 = scalar_lea.vmem %s0, 25
    %v234 = vld [vmem:[%s233] sm:$0x1]
    %235 = vrot.lane.b32.xlu0 %v234, 50
    %v236 = vpop.permute.xlu0 %235
    %vm237 = vcmask 425360
    %238 = vst.msk [vmem:[#allocation0] sm:$0x1] %vm237, %v236
    %s239 = scalar_lea.vmem %s0, 24
    %v240 = vld [vmem:[%s239] sm:$0x1]
    %241 = vrot.lane.b32.xlu0 %v240, 48
    %v242 = vpop.permute.xlu0 %241
    %vm243 = vcmask 408960
    %244 = vst.msk [vmem:[#allocation0] sm:$0x1] %vm243, %v242
    %s245 = scalar_lea.vmem %s0, 23
    %v246 = vld [vmem:[%s245] sm:$0x1]
    %247 = vrot.lane.b32.xlu0 %v246, 46
    %v248 = vpop.permute.xlu0 %247
    %vm249 = vcmask 392560
    %250 = vst.msk [vmem:[#allocation0] sm:$0x1] %vm249, %v248
    %s251 = scalar_lea.vmem %s0, 22
    %v252 = vld [vmem:[%s251] sm:$0x1]
    %253 = vrot.lane.b32.xlu0 %v252, 44
    %v254 = vpop.permute.xlu0 %253
    %vm255 = vcmask 376160
    %256 = vst.msk [vmem:[#allocation0] sm:$0x1] %vm255, %v254
    %s257 = scalar_lea.vmem %s0, 21
    %v258 = vld [vmem:[%s257] sm:$0x1]
    %259 = vrot.lane.b32.xlu0 %v258, 42
    %v260 = vpop.permute.xlu0 %259
    %vm261 = vcmask 359760
    %262 = vst.msk [vmem:[#allocation0] sm:$0x1] %vm261, %v260
    %s263 = scalar_lea.vmem %s0, 20
    %v264 = vld [vmem:[%s263] sm:$0x1]
    %265 = vrot.lane.b32.xlu0 %v264, 40
    %v266 = vpop.permute.xlu0 %265
    %vm267 = vcmask 343360
    %268 = vst.msk [vmem:[#allocation0] sm:$0x1] %vm267, %v266
    %s269 = scalar_lea.vmem %s0, 19
    %v270 = vld [vmem:[%s269] sm:$0x1]
    %271 = vrot.lane.b32.xlu0 %v270, 38
    %v272 = vpop.permute.xlu0 %271
    %vm273 = vcmask 326960
    %274 = vst.msk [vmem:[#allocation0] sm:$0x1] %vm273, %v272
    %s275 = scalar_lea.vmem %s0, 18
    %v276 = vld [vmem:[%s275] sm:$0x1]
    %277 = vrot.lane.b32.xlu0 %v276, 36
    %v278 = vpop.permute.xlu0 %277
    %vm279 = vcmask 310560
    %280 = vst.msk [vmem:[#allocation0] sm:$0x1] %vm279, %v278
    %s281 = scalar_lea.vmem %s0, 17
    %v282 = vld [vmem:[%s281] sm:$0x1]
    %283 = vrot.lane.b32.xlu0 %v282, 34
    %v284 = vpop.permute.xlu0 %283
    %vm285 = vcmask 294160
    %286 = vst.msk [vmem:[#allocation0] sm:$0x1] %vm285, %v284
    %s287 = scalar_lea.vmem %s0, 16
    %v288 = vld [vmem:[%s287] sm:$0x1]
    %289 = vrot.lane.b32.xlu0 %v288, 32
    %v290 = vpop.permute.xlu0 %289
    %vm291 = vcmask 277760
    %292 = vst.msk [vmem:[#allocation0] sm:$0x1] %vm291, %v290
    %s293 = scalar_lea.vmem %s0, 15
    %v294 = vld [vmem:[%s293] sm:$0x1]
    %295 = vrot.lane.b32.xlu0 %v294, 30
    %v296 = vpop.permute.xlu0 %295
    %vm297 = vcmask 261360
    %298 = vst.msk [vmem:[#allocation0] sm:$0x1] %vm297, %v296
    %s299 = scalar_lea.vmem %s0, 14
    %v300 = vld [vmem:[%s299] sm:$0x1]
    %301 = vrot.lane.b32.xlu0 %v300, 28
    %v302 = vpop.permute.xlu0 %301
    %vm303 = vcmask 244960
    %304 = vst.msk [vmem:[#allocation0] sm:$0x1] %vm303, %v302
    %s305 = scalar_lea.vmem %s0, 13
    %v306 = vld [vmem:[%s305] sm:$0x1]
    %307 = vrot.lane.b32.xlu0 %v306, 26
    %v308 = vpop.permute.xlu0 %307
    %vm309 = vcmask 228560
    %310 = vst.msk [vmem:[#allocation0] sm:$0x1] %vm309, %v308
    %s311 = scalar_lea.vmem %s0, 12
    %v312 = vld [vmem:[%s311] sm:$0x1]
    %313 = vrot.lane.b32.xlu0 %v312, 24
    %v314 = vpop.permute.xlu0 %313
    %vm315 = vcmask 212160
    %316 = vst.msk [vmem:[#allocation0] sm:$0x1] %vm315, %v314
    %s317 = scalar_lea.vmem %s0, 11
    %v318 = vld [vmem:[%s317] sm:$0x1]
    %319 = vrot.lane.b32.xlu0 %v318, 22
    %v320 = vpop.permute.xlu0 %319
    %vm321 = vcmask 195760
    %322 = vst.msk [vmem:[#allocation0] sm:$0x1] %vm321, %v320
    %s323 = scalar_lea.vmem %s0, 10
    %v324 = vld [vmem:[%s323] sm:$0x1]
    %325 = vrot.lane.b32.xlu0 %v324, 20
    %v326 = vpop.permute.xlu0 %325
    %vm327 = vcmask 179360
    %328 = vst.msk [vmem:[#allocation0] sm:$0x1] %vm327, %v326
    %s329 = scalar_lea.vmem %s0, 9
    %v330 = vld [vmem:[%s329] sm:$0x1]
    %331 = vrot.lane.b32.xlu0 %v330, 18
    %v332 = vpop.permute.xlu0 %331
    %vm333 = vcmask 162960
    %334 = vst.msk [vmem:[#allocation0] sm:$0x1] %vm333, %v332
    %s335 = scalar_lea.vmem %s0, 8
    %v336 = vld [vmem:[%s335] sm:$0x1]
    %337 = vrot.lane.b32.xlu0 %v336, 16
    %v338 = vpop.permute.xlu0 %337
    %vm339 = vcmask 146560
    %340 = vst.msk [vmem:[#allocation0] sm:$0x1] %vm339, %v338
    %s341 = scalar_lea.vmem %s0, 7
    %v342 = vld [vmem:[%s341] sm:$0x1]
    %343 = vrot.lane.b32.xlu0 %v342, 14
    %v344 = vpop.permute.xlu0 %343
    %vm345 = vcmask 130160
    %346 = vst.msk [vmem:[#allocation0] sm:$0x1] %vm345, %v344
    %s347 = scalar_lea.vmem %s0, 6
    %v348 = vld [vmem:[%s347] sm:$0x1]
    %349 = vrot.lane.b32.xlu0 %v348, 12
    %v350 = vpop.permute.xlu0 %349
    %vm351 = vcmask 113760
    %352 = vst.msk [vmem:[#allocation0] sm:$0x1] %vm351, %v350
    %s353 = scalar_lea.vmem %s0, 5
    %v354 = vld [vmem:[%s353] sm:$0x1]
    %355 = vrot.lane.b32.xlu0 %v354, 10
    %v356 = vpop.permute.xlu0 %355
    %vm357 = vcmask 97360
    %358 = vst.msk [vmem:[#allocation0] sm:$0x1] %vm357, %v356
    %s359 = scalar_lea.vmem %s0, 4
    %v360 = vld [vmem:[%s359] sm:$0x1]
    %361 = vrot.lane.b32.xlu0 %v360, 8
    %v362 = vpop.permute.xlu0 %361
    %vm363 = vcmask 80960
    %364 = vst.msk [vmem:[#allocation0] sm:$0x1] %vm363, %v362
    %s365 = scalar_lea.vmem %s0, 3
    %v366 = vld [vmem:[%s365] sm:$0x1]
    %367 = vrot.lane.b32.xlu0 %v366, 6
    %v368 = vpop.permute.xlu0 %367
    %vm369 = vcmask 64560
    %370 = vst.msk [vmem:[#allocation0] sm:$0x1] %vm369, %v368
    %s371 = scalar_lea.vmem %s0, 2
    %v372 = vld [vmem:[%s371] sm:$0x1]
    %373 = vrot.lane.b32.xlu0 %v372, 4
    %v374 = vpop.permute.xlu0 %373
    %vm375 = vcmask 48160
    %376 = vst.msk [vmem:[#allocation0] sm:$0x1] %vm375, %v374
    %s377 = scalar_lea.vmem %s0, 1
    %v378 = vld [vmem:[%s377] sm:$0x1]
    %379 = vrot.lane.b32.xlu0 %v378, 2
    %v380 = vpop.permute.xlu0 %379
    %vm381 = vcmask 31760
    %382 = vst.msk [vmem:[#allocation0] sm:$0x1] %vm381, %v380
    %s384 = sshllo.u32 0, 1
    %v386 = vld [vmem:[#allocation0] sm:%s384]
    %s387 = sshllo.u32 0, 1
    %388 = vst [vmem:[%s1] sm:%s387] %v386

// kernel: dummy_net_forward.1
$region0: #{dummy_net_forward.1}
  #allocation0 [shape = 'u32[]', space=smem, size = 0x4, offset = 0x4, fixed_abs, tag = 'smem constant byte address 0x4 - core index']
  #allocation1 [shape = 'u32[144,128]{1,0:T(1,128)}', space=vmem, size = 0x12000, scoped, tag = 'internal scratch']
  %s0 = inlined_call_operand.vmem [shape: f32[256,128], index: 0, kind: input, shape index: {}]
  %s1 = inlined_call_operand.vmem [shape: f32[1,128], index: 1, kind: input, shape index: {}]
  %s2 = inlined_call_operand.vmem [shape: f32[1,256], index: 2, kind: input, shape index: {}]
  %s3 = inlined_call_operand.vmem [shape: f32[1,128], index: 3, kind: output, shape index: {}]
  %s4 = sld [smem:[#allocation0]]
  $region22: #{dummy_net_forward.1} parent=0
    _
  %s6 = ssub.s32 1, %s4
  %s7 = scalar_select 0, %s6, %s4
  // Predicated region
  $region2: #{dummy_net_forward.1} parent=0 // pred_check
    _
  $region3: #{dummy_net_forward.1} parent=0 // pred_check_branch
    %9 = sbr.rel (0) target = $region5
  $region4: #{dummy_net_forward.1} parent=0 // pred_region
    _
  $region5: #{dummy_net_forward.1} parent=0 // pred_fallthru
    _
  // Predicated region
  $region6: #{dummy_net_forward.1} parent=0 // pred_check
    _
  $region7: #{dummy_net_forward.1} parent=0 // pred_check_branch
    %11 = sbr.rel (0) target = $region9
  $region8: #{dummy_net_forward.1} parent=0 // pred_region
    _
  $region9: #{dummy_net_forward.1} parent=0 // pred_fallthru
    _
  // Predicated region
  $region10: #{dummy_net_forward.1} parent=0 // pred_check
    _
  $region11: #{dummy_net_forward.1} parent=0 // pred_check_branch
    %13 = sbr.rel (0) target = $region13
  $region12: #{dummy_net_forward.1} parent=0 // pred_region
    _
  $region13: #{dummy_net_forward.1} parent=0 // pred_fallthru
    _
  %v14 = vld [vmem:[%s2] sm:$0x3]
  %v15 = vld [vmem:[%s0] sm:$0xff]
  %v16 = vld [vmem:[%s0 + $0x8] sm:$0xff]
  %v17 = vld [vmem:[%s0 + $0x10] sm:$0xff]
  %v18 = vld [vmem:[%s0 + $0x18] sm:$0xff]
  %v19 = vld [vmem:[%s0 + $0x20] sm:$0xff]
  %v20 = vld [vmem:[%s0 + $0x28] sm:$0xff]
  %v21 = vld [vmem:[%s0 + $0x30] sm:$0xff]
  %v22 = vld [vmem:[%s0 + $0x38] sm:$0xff]
  %v23 = vld [vmem:[%s0 + $0x40] sm:$0xff]
  %v24 = vld [vmem:[%s0 + $0x48] sm:$0xff]
  %v25 = vld [vmem:[%s0 + $0x50] sm:$0xff]
  %v26 = vld [vmem:[%s0 + $0x58] sm:$0xff]
  %v27 = vld [vmem:[%s0 + $0x60] sm:$0xff]
  %v28 = vld [vmem:[%s0 + $0x68] sm:$0xff]
  %v29 = vld [vmem:[%s0 + $0x70] sm:$0xff]
  %v30 = vld [vmem:[%s0 + $0x78] sm:$0xff]
  %v31 = vld [vmem:[%s0 + $0x80] sm:$0xff]
  %v32 = vld [vmem:[%s0 + $0x88] sm:$0xff]
  %v33 = vld [vmem:[%s0 + $0x90] sm:$0xff]
  %v34 = vld [vmem:[%s0 + $0x98] sm:$0xff]
  %v35 = vld [vmem:[%s0 + $0xa0] sm:$0xff]
  %v36 = vld [vmem:[%s0 + $0xa8] sm:$0xff]
  %v37 = vld [vmem:[%s0 + $0xb0] sm:$0xff]
  %v38 = vld [vmem:[%s0 + $0xb8] sm:$0xff]
  %v39 = vld [vmem:[%s0 + $0xc0] sm:$0xff]
  %v40 = vld [vmem:[%s0 + $0xc8] sm:$0xff]
  %v41 = vld [vmem:[%s0 + $0xd0] sm:$0xff]
  %v42 = vld [vmem:[%s0 + $0xd8] sm:$0xff]
  %v43 = vld [vmem:[%s0 + $0xe0] sm:$0xff]
  %v44 = vld [vmem:[%s0 + $0xe8] sm:$0xff]
  %v45 = vld [vmem:[%s0 + $0xf0] sm:$0xff]
  %v46 = vld [vmem:[%s0 + $0xf8] sm:$0xff]
  %v47 = vld [vmem:[%s1] sm:$0x1]
  %v49 = vlaneseq
  %v50 = vshrl.u32 %v49, 7
  %v51 = vsub.s32 0, %v50
  %v52 = vrot.slane %v14, %v51
  %v53 = vlaneseq
  %v54 = vshrl.u32 %v53, 7
  %v55 = vsub.s32 1, %v54
  %v56 = vrot.slane %v14, %v55
  %59 = vmatprep.subr.mxu0 0.0
  %60 = vmatpush1.msra.mxu0 %v15
  %61 = vmatprep.subr.mxu0 0.0
  %62 = vmatpush1.msra.mxu0 %v16
  %63 = vmatprep.subr.mxu0 0.0
  %64 = vmatpush1.msra.mxu0 %v17
  %65 = vmatprep.subr.mxu0 0.0
  %66 = vmatpush1.msra.mxu0 %v18
  %67 = vmatprep.subr.mxu0 0.0
  %68 = vmatpush1.msra.mxu0 %v19
  %69 = vmatprep.subr.mxu0 0.0
  %70 = vmatpush1.msra.mxu0 %v20
  %71 = vmatprep.subr.mxu0 0.0
  %72 = vmatpush1.msra.mxu0 %v21
  %73 = vmatprep.subr.mxu0 0.0
  %74 = vmatpush1.msra.mxu0 %v22
  %75 = vmatprep.subr.mxu0 0.0
  %76 = vmatpush1.msra.mxu0 %v23
  %77 = vmatprep.subr.mxu0 0.0
  %78 = vmatpush1.msra.mxu0 %v24
  %79 = vmatprep.subr.mxu0 0.0
  %80 = vmatpush1.msra.mxu0 %v25
  %81 = vmatprep.subr.mxu0 0.0
  %82 = vmatpush1.msra.mxu0 %v26
  %83 = vmatprep.subr.mxu0 0.0
  %84 = vmatpush1.msra.mxu0 %v27
  %85 = vmatprep.subr.mxu0 0.0
  %86 = vmatpush1.msra.mxu0 %v28
  %87 = vmatprep.subr.mxu0 0.0
  %88 = vmatpush1.msra.mxu0 %v29
  %89 = vmatprep.subr.mxu0 0.0
  %90 = vmatpush1.msra.mxu0 %v30
  %91 = vmatprep.subr.mxu0 0.0
  %92 = vmatpush1.msra.mxu0 %v31
  %93 = vmatprep.subr.mxu0 0.0
  %94 = vmatpush1.msra.mxu0 %v32
  %95 = vmatprep.subr.mxu0 0.0
  %96 = vmatpush1.msra.mxu0 %v33
  %97 = vmatprep.subr.mxu0 0.0
  %98 = vmatpush1.msra.mxu0 %v34
  %99 = vmatprep.subr.mxu0 0.0
  %100 = vmatpush1.msra.mxu0 %v35
  %101 = vmatprep.subr.mxu0 0.0
  %102 = vmatpush1.msra.mxu0 %v36
  %103 = vmatprep.subr.mxu0 0.0
  %104 = vmatpush1.msra.mxu0 %v37
  %105 = vmatprep.subr.mxu0 0.0
  %106 = vmatpush1.msra.mxu0 %v38
  %107 = vmatprep.subr.mxu0 0.0
  %108 = vmatpush1.msra.mxu0 %v39
  %109 = vmatprep.subr.mxu0 0.0
  %110 = vmatpush1.msra.mxu0 %v40
  %111 = vmatprep.subr.mxu0 0.0
  %112 = vmatpush1.msra.mxu0 %v41
  %113 = vmatprep.subr.mxu0 0.0
  %114 = vmatpush1.msra.mxu0 %v42
  %115 = vmatprep.subr.mxu0 0.0
  %116 = vmatpush1.msra.mxu0 %v43
  %117 = vmatprep.subr.mxu0 0.0
  %118 = vmatpush1.msra.mxu0 %v44
  %119 = vmatprep.subr.mxu0 0.0
  %120 = vmatpush1.msra.mxu0 %v45
  %121 = vmatprep.subr.mxu0 0.0
  %122 = vmatpush1.msra.mxu0 %v46
  %123 = vmatprep.mubr.f32.mxu0 %v56
  %124 = vmatmul.mubr.f32.gmra.mrb[0].mxu0 %v52
  %v125 = vpop.f32.mrb[0].mxu0
  %v126 = vadd.f32 %v47, %v125
  %v127 = vpop.f32.mrb[0].mxu0
  %128 = vdwg.mxu0
  %129 = vst [vmem:[%s3] sm:$0x1] %v126
  // Predicated region
  $region14: #{dummy_net_forward.1} parent=0 // pred_check
    _
  $region15: #{dummy_net_forward.1} parent=0 // pred_check_branch
    %131 = sbr.rel (0) target = $region17
  $region16: #{dummy_net_forward.1} parent=0 // pred_region
    _
  $region17: #{dummy_net_forward.1} parent=0 // pred_fallthru
    _
  // Predicated region
  $region18: #{dummy_net_forward.1} parent=0 // pred_check
    _
  $region19: #{dummy_net_forward.1} parent=0 // pred_check_branch
    %133 = sbr.rel (0) target = $region21
  $region20: #{dummy_net_forward.1} parent=0 // pred_region
    _
  $region21: #{dummy_net_forward.1} parent=0 // pred_fallthru
    _

</llo_original>
